<compile_context>
chip_gen: v7x
topology: tpu7x:2x2x1
jax: 0.10.0
libtpu: 0.0.40
codegen_flags: <defaults>
</compile_context>

<pallas_src>
import functools

import jax
import jax.numpy as jnp
from jax.experimental import pallas as pl
from jax.experimental.pallas import tpu as pltpu

HIDDEN = 32
PALETTE = 3
BN_EPS = 1e-5

# ---- packed parameter-slab layout (f32, 128 lanes wide, DMA'd once) -----------------
SLAB_COLS = 128
SLAB_ROWS = 112
R_GRU = HIDDEN   # rows H:3H+P  cols 0:4H -> fused GRU weight, rows [hidden|palette|context]
R_VEC = 104      # row 104: be+bh | wen | b1 | gamma
#                  row 105: fused GRU bias [r | z | n_i | n_h]
#                  row 106: beta | b2
# rows 0:H: cols 0:H -> We, H:2H -> Wh, 2H:3H -> W1, 3H:3H+P -> W2

OUT_ROWS = 8     # batch rows padded to a full 8-sublane tile for unmasked stores
OUT_COLS = 128   # per-step output slab: [context | h_new | palette | 0]


def _pad_tile(x, rows, cols):
    """Zero-pad a (b, c) register tile to (rows, cols) so the store is unmasked."""
    b, c = x.shape
    if c < cols:
        x = jnp.concatenate([x, jnp.zeros((b, cols - c), x.dtype)], axis=1)
    if b < rows:
        x = jnp.concatenate([x, jnp.zeros((rows - b, cols), x.dtype)], axis=0)
    return x


def _decoder_kernel(step_offset, S, B, H, P,
                    enc_ref, h0_ref, p0_ref, w_ref, out_ref, state_ref):
    """One decode step per grid iteration.

    enc_ref:   (S*B, H)   encoder outputs, row r = s*B + b   (VMEM-resident, DMA'd once)
    h0_ref:    (B, H)     initial decoder hidden             (consumed at grid step 0)
    p0_ref:    (B, P)     initial palette                    (consumed at grid step 0)
    w_ref:     (112, 128) packed parameter slab              (VMEM-resident, DMA'd once)
    out_ref:   (8, 128)   per-step output slab [context | h_new | palette | 0]
    state_ref: (8, 128)   VMEM scratch carrying [hidden | palette] across grid steps
    """
    f32 = jnp.float32
    step = pl.program_id(0)
    t = step + step_offset            # decode-time index; t == 0 -> mean-context branch

    # first grid step: load the carried state from the inputs (one full-tile store)
    @pl.when(step == 0)
    def _():
        state_ref[...] = _pad_tile(
            jnp.concatenate([h0_ref[...], p0_ref[...]], axis=1), OUT_ROWS, OUT_COLS)

    hidden = state_ref[0:B, 0:H]              # (B, H)
    last_palette = state_ref[0:B, H:H + P]    # (B, P)
    enc = enc_ref[...]                        # (S*B, H)

    # batch-selection masks generated in-kernel (no HBM mask tiles, no wrapper assembly):
    #   mask  (S*B, B): mask[r, b] = 1.0 iff r % B == b     maskt (B, S*B): its transpose
    rb = jax.lax.broadcasted_iota(jnp.int32, (B, B), 0)
    cb = jax.lax.broadcasted_iota(jnp.int32, (B, B), 1)
    eye = (rb == cb).astype(f32)
    mask = jnp.concatenate([eye] * S, axis=0)     # (S*B, B)
    maskt = jnp.concatenate([eye] * S, axis=1)    # (B, S*B)

    # ---- attention scores: wen . sigmoid(enc@We + hidden@Wh + be + bh) ----
    we = w_ref[0:H, 0:H]
    wh = w_ref[0:H, H:2 * H]
    beh = w_ref[R_VEC:R_VEC + 1, 0:H]             # be + bh (pre-summed)
    wen = w_ref[R_VEC:R_VEC + 1, H:2 * H]
    hb = jnp.dot(hidden, wh, preferred_element_type=f32) + beh       # (B, H)
    hb_t = jnp.concatenate([hb] * S, axis=0)                         # (S*B, H): row r -> hb[r % B]
    sig = jax.nn.sigmoid(jnp.dot(enc, we, preferred_element_type=f32) + hb_t)
    energy = jnp.sum(sig * wen, axis=-1, keepdims=True)              # (S*B, 1)
    # (the scalar attn_energy bias is a constant shift -> softmax-invariant, dropped)

    # ---- masked per-batch softmax over the sequence axis ----
    e2 = energy * mask + (mask - 1.0) * 1e30                         # (S*B, B)
    mcol = jnp.max(e2, axis=0, keepdims=True)                        # (1, B)
    pexp = jnp.exp(e2 - mcol) * mask                                 # (S*B, B)
    # exact reciprocal on purpose: BatchNorm1d over batch=2 amplifies tiny cross-batch
    # deltas by ~1/sqrt(eps); approx=True buys nothing here (EUP is otherwise idle).
    inv = pl.reciprocal(jnp.sum(pexp, axis=0, keepdims=True))        # (1, B)
    w_attn = pexp * inv                                              # (S*B, B)
    w_mean = mask * (1.0 / S)                                        # mean-context weights
    use_mean = (t == 0).astype(f32)                                  # scalar blend, no select
    w_ctx = use_mean * w_mean + (1.0 - use_mean) * w_attn            # (S*B, B)

    # context[b, :] = sum_r w_ctx[r, b] * enc[r, :]  (one standard NN matmul)
    w_seq = jnp.sum(w_ctx, axis=1, keepdims=True)                    # (S*B, 1)
    context = jnp.dot(maskt, w_seq * enc, preferred_element_type=f32)  # (B, H)

    # ---- GRUCell: single fused (B, 2H+P) @ (2H+P, 4H) matmul, both biases folded ----
    w_gru = w_ref[R_GRU:R_GRU + 2 * H + P, 0:4 * H]
    b_gru = w_ref[R_VEC + 1:R_VEC + 2, 0:4 * H]
    x = jnp.concatenate([hidden, last_palette, context], axis=1)     # (B, 2H+P)
    u = jnp.dot(x, w_gru, preferred_element_type=f32) + b_gru        # (B, 4H) = [r|z|n_i|n_h]
    r = jax.nn.sigmoid(u[:, 0:H])
    z = jax.nn.sigmoid(u[:, H:2 * H])
    n = jnp.tanh(u[:, 2 * H:3 * H] + r * u[:, 3 * H:4 * H])
    h_new = (1.0 - z) * n + z * hidden                               # (B, H)

    # ---- out head: Linear -> ReLU -> BatchNorm1d (train-mode batch stats) -> Linear ----
    w1 = w_ref[0:H, 2 * H:3 * H]
    b1 = w_ref[R_VEC:R_VEC + 1, 2 * H:3 * H]
    gamma = w_ref[R_VEC:R_VEC + 1, 3 * H:4 * H]
    beta = w_ref[R_VEC + 2:R_VEC + 3, 0:H]
    w2 = w_ref[0:H, 3 * H:3 * H + P]
    b2 = w_ref[R_VEC + 2:R_VEC + 3, H:H + P]
    y = jnp.maximum(jnp.dot(h_new, w1, preferred_element_type=f32) + b1, 0.0)
    mu = jnp.mean(y, axis=0, keepdims=True)
    var = jnp.mean((y - mu) * (y - mu), axis=0, keepdims=True)       # biased variance
    yn = (y - mu) * jax.lax.rsqrt(var + BN_EPS) * gamma + beta
    palette = jnp.dot(yn, w2, preferred_element_type=f32) + b2       # (B, P)

    # ---- one unmasked (8, 128) store per result tile ----
    out_ref[...] = _pad_tile(
        jnp.concatenate([context, h_new, palette], axis=1), OUT_ROWS, OUT_COLS)
    # carry [h_new | palette] to the next decode step
    state_ref[...] = _pad_tile(
        jnp.concatenate([h_new, palette], axis=1), OUT_ROWS, OUT_COLS)


def _run_decoder(params_slab, hidden0, palette0, encoder_outputs, n_steps, step_offset):
    S, B, H = encoder_outputs.shape
    P = palette0.shape[1]
    SB = S * B
    assert H == HIDDEN and P == PALETTE and B <= OUT_ROWS
    enc_flat = encoder_outputs.reshape(SB, H)                # row r = s*B + b
    kernel = functools.partial(_decoder_kernel, step_offset, S, B, H, P)
    return pl.pallas_call(
        kernel,
        out_shape=jax.ShapeDtypeStruct((n_steps, OUT_ROWS, OUT_COLS), jnp.float32),
        grid=(n_steps,),
        in_specs=[
            pl.BlockSpec((SB, H), lambda t: (0, 0)),                  # enc: resident
            pl.BlockSpec((B, H), lambda t: (0, 0)),                   # initial hidden
            pl.BlockSpec((B, P), lambda t: (0, 0)),                   # initial palette
            pl.BlockSpec((SLAB_ROWS, SLAB_COLS), lambda t: (0, 0)),   # params: resident
        ],
        out_specs=pl.BlockSpec((None, OUT_ROWS, OUT_COLS), lambda t: (t, 0, 0)),
        scratch_shapes=[pltpu.VMEM((OUT_ROWS, OUT_COLS), jnp.float32)],
        compiler_params=pltpu.CompilerParams(dimension_semantics=("arbitrary",)),
    )(enc_flat, hidden0, palette0, params_slab)


@functools.partial(jax.jit, static_argnums=(5,))
def attn_decoder_forward(params_slab, last_palette, last_decoder_hidden,
                         encoder_outputs, each_input_size, i):
    """Single-step forward mirroring AttnDecoderRNN.forward (`i` is a Python int)."""
    del each_input_size                      # accepted but unused (as in the PyTorch module)
    S, B, H = encoder_outputs.shape
    P = last_palette.shape[1]
    out = _run_decoder(params_slab, last_decoder_hidden, last_palette,
                       encoder_outputs, 1, i)
    row = out[0, :B]
    context = row[:, 0:H]
    h_new = row[:, H:2 * H]
    palette = row[:, 2 * H:2 * H + P]
    # torch: i==0 -> mean keepdim then unsqueeze(0); i>0 -> bmm (B,1,H) then unsqueeze(0)
    ctx = context.reshape(1, 1, B, H) if i == 0 else context.reshape(1, B, 1, H)
    return palette, ctx, h_new


@functools.partial(jax.jit, static_argnums=(4,))
def attn_decoder_decode(params_slab, palette0, hidden0, encoder_outputs, n_steps):
    """Fused autoregressive decode: n_steps in ONE pallas_call.  Weights and encoder
    outputs stay VMEM-resident; hidden/palette are carried in VMEM scratch; the
    generated palette feeds back as the next step's last_palette."""
    S, B, H = encoder_outputs.shape
    P = palette0.shape[1]
    out = _run_decoder(params_slab, hidden0, palette0, encoder_outputs, n_steps, 0)
    rows = out[:, :B]                                        # (T, B, 128)
    return (rows[..., 2 * H:2 * H + P],                      # palettes (T, B, P)
            rows[..., 0:H],                                  # contexts (T, B, H)
            rows[..., H:2 * H])                              # hiddens  (T, B, H)


# ------------------------------- parameter handling ----------------------------------
def init_params(key, hidden=HIDDEN, palette=PALETTE):
    H, P = hidden, palette
    ks = jax.random.split(key, 14)

    def u(k, shape, fan_in):
        bound = float(fan_in) ** -0.5
        return jax.random.uniform(k, shape, jnp.float32, -bound, bound)

    return dict(
        # Attn (Linear weights pre-transposed: y = x @ W + b)
        we=u(ks[0], (H, H), H), be=u(ks[1], (1, H), H),
        wh=u(ks[2], (H, H), H), bh=u(ks[3], (1, H), H),
        wen=u(ks[4], (1, H), H), ben=u(ks[5], (1, 1), H),
        # GRUCell: weight_ih^T rows ordered like cat([palette, context])
        wih=u(ks[6], (P + H, 3 * H), H),
        whh=u(ks[7], (H, 3 * H), H),
        bih=u(ks[8], (1, 3 * H), H), bhh=u(ks[9], (1, 3 * H), H),
        # out head
        w1=u(ks[10], (H, H), H), b1=u(ks[11], (1, H), H),
        gamma=jnp.ones((1, H), jnp.float32), beta=jnp.zeros((1, H), jnp.float32),
        w2=u(ks[12], (H, P), H), b2=u(ks[13], (1, P), H),
    )


def pack_params(p):
    """Pack every parameter into a single (112, 128) f32 slab (one input DMA, resident)."""
    H, P = HIDDEN, PALETTE
    slab = jnp.zeros((SLAB_ROWS, SLAB_COLS), jnp.float32)
    # square weights block
    slab = slab.at[0:H, 0:H].set(p['we'])
    slab = slab.at[0:H, H:2 * H].set(p['wh'])
    slab = slab.at[0:H, 2 * H:3 * H].set(p['w1'])
    slab = slab.at[0:H, 3 * H:3 * H + P].set(p['w2'])
    # fused GRU weight: lhs rows [hidden | palette | context], cols [r | z | n_i | n_h]
    wih_p, wih_c = p['wih'][:P], p['wih'][P:]
    whh = p['whh']
    w_gru = jnp.zeros((2 * H + P, 4 * H), jnp.float32)
    w_gru = w_gru.at[0:H, 0:2 * H].set(whh[:, 0:2 * H])              # hidden  -> r, z
    w_gru = w_gru.at[0:H, 3 * H:4 * H].set(whh[:, 2 * H:3 * H])      # hidden  -> n_h
    w_gru = w_gru.at[H:H + P, 0:3 * H].set(wih_p)                    # palette -> r, z, n_i
    w_gru = w_gru.at[H + P:2 * H + P, 0:3 * H].set(wih_c)            # context -> r, z, n_i
    slab = slab.at[R_GRU:R_GRU + 2 * H + P, 0:4 * H].set(w_gru)
    # bias / vector rows
    slab = slab.at[R_VEC, 0:H].set((p['be'] + p['bh'])[0])
    slab = slab.at[R_VEC, H:2 * H].set(p['wen'][0])
    slab = slab.at[R_VEC, 2 * H:3 * H].set(p['b1'][0])
    slab = slab.at[R_VEC, 3 * H:4 * H].set(p['gamma'][0])
    b_gru = jnp.concatenate([p['bih'][0, 0:2 * H] + p['bhh'][0, 0:2 * H],
                             p['bih'][0, 2 * H:3 * H],
                             p['bhh'][0, 2 * H:3 * H]])
    slab = slab.at[R_VEC + 1, 0:4 * H].set(b_gru)
    slab = slab.at[R_VEC + 2, 0:H].set(p['beta'][0])
    slab = slab.at[R_VEC + 2, H:H + P].set(p['b2'][0])
    # ben is dropped: a constant pre-softmax shift is a mathematical no-op.
    return slab


# ---------------------------- pure-JAX reference (for checks) ------------------------
def _reference_forward(p, last_palette, hidden, enc, i):
    S, B, H = enc.shape
    if i == 0:
        context = jnp.mean(enc, axis=0)
    else:
        e = jnp.einsum('sbh,hk->sbk', enc, p['we']) + p['be']
        h = hidden @ p['wh'] + p['bh']
        sig = jax.nn.sigmoid(e + h[None])
        energy = jnp.sum(sig * p['wen'], axis=-1) + p['ben'][0, 0]   # (S, B)
        w = jax.nn.softmax(energy, axis=0)                           # Softmax(dim=0)
        context = jnp.einsum('sb,sbh->bh', w, enc)
    gi = jnp.concatenate([last_palette, context], axis=1) @ p['wih'] + p['bih']
    gh = hidden @ p['whh'] + p['bhh']
    r = jax.nn.sigmoid(gi[:, :H] + gh[:, :H])
    z = jax.nn.sigmoid(gi[:, H:2 * H] + gh[:, H:2 * H])
    n = jnp.tanh(gi[:, 2 * H:] + r * gh[:, 2 * H:])
    h_new = (1.0 - z) * n + z * hidden
    y = jnp.maximum(h_new @ p['w1'] + p['b1'], 0.0)
    mu = jnp.mean(y, axis=0, keepdims=True)
    var = jnp.mean((y - mu) ** 2, axis=0, keepdims=True)
    yn = (y - mu) * jax.lax.rsqrt(var + BN_EPS) * p['gamma'] + p['beta']
    pal = yn @ p['w2'] + p['b2']
    ctx = context.reshape(1, 1, B, H) if i == 0 else context.reshape(1, B, 1, H)
    return pal, ctx, h_new


def _reference_decode(p, palette0, hidden0, enc, n_steps):
    S, B, H = enc.shape
    pal, hid = palette0, hidden0
    pals, ctxs, hids = [], [], []
    for t in range(n_steps):
        pal, ctx, hid = _reference_forward(p, pal, hid, enc, t)
        pals.append(pal)
        ctxs.append(ctx.reshape(B, H))
        hids.append(hid)
    return jnp.stack(pals), jnp.stack(ctxs), jnp.stack(hids)


if __name__ == "__main__":
    key = jax.random.PRNGKey(0)
    kp, k1, k2, k3 = jax.random.split(key, 4)
    params = init_params(kp)
    wslab = pack_params(params)            # one-time pack into a single lane-dense slab

    B, S, H, P = 2, 8, HIDDEN, PALETTE
    last_palette = jax.random.normal(k1, (B, P), jnp.float32)
    last_decoder_hidden = jax.random.normal(k2, (B, H), jnp.float32)
    encoder_outputs = jax.random.normal(k3, (S, B, H), jnp.float32)
    each_input_size = jnp.full((B,), S, jnp.int32)   # unused, mirrors torch signature

    ok = True
    # single-step forward: exercise both the mean-context (i==0) and attention branches
    for step in (0, 3):
        pal, ctx, h_new = attn_decoder_forward(
            wslab, last_palette, last_decoder_hidden, encoder_outputs,
            each_input_size, step)
        jax.block_until_ready((pal, ctx, h_new))
        r_pal, r_ctx, r_h = _reference_forward(
            params, last_palette, last_decoder_hidden, encoder_outputs, step)
        ok &= bool(jnp.allclose(pal, r_pal, rtol=2e-3, atol=5e-4))
        ok &= bool(jnp.allclose(ctx, r_ctx, rtol=2e-3, atol=5e-4))
        ok &= bool(jnp.allclose(h_new, r_h, rtol=2e-3, atol=5e-4))

    # fused multi-step decode: one pallas_call, weights resident, state in scratch
    T = 4
    pal_seq, ctx_seq, hid_seq = attn_decoder_decode(
        wslab, last_palette, last_decoder_hidden, encoder_outputs, T)
    jax.block_until_ready((pal_seq, ctx_seq, hid_seq))
    r_pal_seq, r_ctx_seq, r_hid_seq = _reference_decode(
        params, last_palette, last_decoder_hidden, encoder_outputs, T)
    ok &= bool(jnp.allclose(pal_seq, r_pal_seq, rtol=2e-3, atol=1e-3))
    ok &= bool(jnp.allclose(ctx_seq, r_ctx_seq, rtol=2e-3, atol=1e-3))
    ok &= bool(jnp.allclose(hid_seq, r_hid_seq, rtol=2e-3, atol=1e-3))

    if ok:
        print("KERNEL_OK")
    else:
        raise SystemExit("mismatch vs pure-JAX reference")
</pallas_src>

<mosaic_0001>
module attributes {stable_mosaic.version = 11 : i64} {
  func.func @_decoder_kernel(%arg0: i32, %arg1: memref<16x32xf32, #tpu.memory_space<vmem>>, %arg2: memref<2x32xf32, #tpu.memory_space<vmem>>, %arg3: memref<2x3xf32, #tpu.memory_space<vmem>>, %arg4: memref<112x128xf32, #tpu.memory_space<vmem>>, %arg5: memref<1x8x128xf32, #tpu.memory_space<vmem>>, %arg6: memref<8x128xf32, #tpu.memory_space<vmem>>) attributes {dimension_semantics = [#tpu.dimension_semantics<arbitrary>], iteration_bounds = array<i64: 1>, scalar_prefetch = 0 : i64, scratch_operands = 1 : i64, tpu.core_type = #tpu.core_type<tc>, window_params = [{pipeline_mode = #tpu.pipeline_mode<synchronous>, transform_indices = @transform_0, window_bounds = array<i64: 16, 32>}, {pipeline_mode = #tpu.pipeline_mode<synchronous>, transform_indices = @transform_1, window_bounds = array<i64: 2, 32>}, {pipeline_mode = #tpu.pipeline_mode<synchronous>, transform_indices = @transform_2, window_bounds = array<i64: 2, 3>}, {pipeline_mode = #tpu.pipeline_mode<synchronous>, transform_indices = @transform_3, window_bounds = array<i64: 112, 128>}, {transform_indices = @transform_4, window_bounds = array<i64: 1, 8, 128>}]} {
    %c0_i32 = arith.constant 0 : i32
    %0 = arith.addi %arg0, %c0_i32 : i32
    %c0_i32_0 = arith.constant 0 : i32
    %1 = arith.cmpi eq, %arg0, %c0_i32_0 : i32
    %2 = arith.extui %1 : i1 to i32
    %c0_i32_1 = arith.constant 0 : i32
    %3 = arith.cmpi ne, %2, %c0_i32_1 : i32
    scf.if %3 {
      %c0_58 = arith.constant 0 : index
      %c0_59 = arith.constant 0 : index
      %147 = vector.load %arg2[%c0_58, %c0_59] : memref<2x32xf32, #tpu.memory_space<vmem>>, vector<2x32xf32>
      %c0_60 = arith.constant 0 : index
      %c0_61 = arith.constant 0 : index
      %148 = vector.load %arg3[%c0_60, %c0_61] : memref<2x3xf32, #tpu.memory_space<vmem>>, vector<2x3xf32>
      %149 = tpu.concatenate %147, %148 in 1 : vector<2x32xf32>, vector<2x3xf32> -> vector<2x35xf32>
      %cst_62 = arith.constant 0.000000e+00 : f32
      %150 = vector.broadcast %cst_62 : f32 to vector<2x93xf32>
      %151 = tpu.concatenate %149, %150 in 1 : vector<2x35xf32>, vector<2x93xf32> -> vector<2x128xf32>
      %cst_63 = arith.constant 0.000000e+00 : f32
      %152 = vector.broadcast %cst_63 : f32 to vector<6x128xf32>
      %153 = tpu.concatenate %151, %152 in 0 : vector<2x128xf32>, vector<6x128xf32> -> vector<8x128xf32>
      %c0_64 = arith.constant 0 : index
      %c0_65 = arith.constant 0 : index
      %154 = vector.load %arg6[%c0_64, %c0_65] : memref<8x128xf32, #tpu.memory_space<vmem>>, vector<8x128xf32>
      tpu.vector_store %arg6[%c0_64, %c0_65], %153 {strides = array<i32>} : memref<8x128xf32, #tpu.memory_space<vmem>>, vector<8x128xf32>,
    } else {
    }
    %c0 = arith.constant 0 : index
    %c0_2 = arith.constant 0 : index
    %4 = vector.load %arg6[%c0, %c0_2] : memref<8x128xf32, #tpu.memory_space<vmem>>, vector<2x32xf32>
    %c0_3 = arith.constant 0 : index
    %c32 = arith.constant 32 : index
    %5 = vector.load %arg6[%c0_3, %c32] : memref<8x128xf32, #tpu.memory_space<vmem>>, vector<2x3xf32>
    %c0_4 = arith.constant 0 : index
    %c0_5 = arith.constant 0 : index
    %6 = vector.load %arg1[%c0_4, %c0_5] : memref<16x32xf32, #tpu.memory_space<vmem>>, vector<16x32xf32>
    %7 = tpu.iota {dimensions = array<i32: 0>} : vector<2x2xi32>
    %8 = tpu.iota {dimensions = array<i32: 1>} : vector<2x2xi32>
    %9 = arith.cmpi eq, %7, %8 : vector<2x2xi32>
    %10 = arith.extui %9 : vector<2x2xi1> to vector<2x2xi32>
    %11 = arith.sitofp %10 : vector<2x2xi32> to vector<2x2xf32>
    %12 = tpu.concatenate %11, %11, %11, %11, %11, %11, %11, %11 in 0 : vector<2x2xf32>, vector<2x2xf32>, vector<2x2xf32>, vector<2x2xf32>, vector<2x2xf32>, vector<2x2xf32>, vector<2x2xf32>, vector<2x2xf32> -> vector<16x2xf32>
    %13 = tpu.concatenate %11, %11, %11, %11, %11, %11, %11, %11 in 1 : vector<2x2xf32>, vector<2x2xf32>, vector<2x2xf32>, vector<2x2xf32>, vector<2x2xf32>, vector<2x2xf32>, vector<2x2xf32>, vector<2x2xf32> -> vector<2x16xf32>
    %c0_6 = arith.constant 0 : index
    %c0_7 = arith.constant 0 : index
    %14 = vector.load %arg4[%c0_6, %c0_7] : memref<112x128xf32, #tpu.memory_space<vmem>>, vector<32x32xf32>
    %c0_8 = arith.constant 0 : index
    %c32_9 = arith.constant 32 : index
    %15 = vector.load %arg4[%c0_8, %c32_9] : memref<112x128xf32, #tpu.memory_space<vmem>>, vector<32x32xf32>
    %c104 = arith.constant 104 : index
    %c0_10 = arith.constant 0 : index
    %16 = vector.load %arg4[%c104, %c0_10] : memref<112x128xf32, #tpu.memory_space<vmem>>, vector<1x32xf32>
    %c104_11 = arith.constant 104 : index
    %c32_12 = arith.constant 32 : index
    %17 = vector.load %arg4[%c104_11, %c32_12] : memref<112x128xf32, #tpu.memory_space<vmem>>, vector<1x32xf32>
    %cst = arith.constant dense<0.000000e+00> : vector<2x32xf32>
    %18 = tpu.matmul %4, %15, %cst {dimension_numbers = #tpu.dot_dimension_numbers<[1], [0], [0], [1], [0, 0, 1, 1], [], []>} : vector<2x32xf32>, vector<32x32xf32>, vector<2x32xf32> -> vector<2x32xf32>
    %19 = vector.broadcast %16 : vector<1x32xf32> to vector<2x32xf32>
    %20 = arith.addf %18, %19 : vector<2x32xf32>
    %21 = tpu.concatenate %20, %20, %20, %20, %20, %20, %20, %20 in 0 : vector<2x32xf32>, vector<2x32xf32>, vector<2x32xf32>, vector<2x32xf32>, vector<2x32xf32>, vector<2x32xf32>, vector<2x32xf32>, vector<2x32xf32> -> vector<16x32xf32>
    %cst_13 = arith.constant dense<0.000000e+00> : vector<16x32xf32>
    %22 = tpu.matmul %6, %14, %cst_13 {dimension_numbers = #tpu.dot_dimension_numbers<[1], [0], [0], [1], [0, 0, 1, 1], [], []>} : vector<16x32xf32>, vector<32x32xf32>, vector<16x32xf32> -> vector<16x32xf32>
    %23 = arith.addf %22, %21 : vector<16x32xf32>
    %24 = arith.negf %23 : vector<16x32xf32>
    %25 = math.exp %24 : vector<16x32xf32>
    %cst_14 = arith.constant 1.000000e+00 : f32
    %26 = vector.broadcast %cst_14 : f32 to vector<16x32xf32>
    %27 = arith.addf %26, %25 : vector<16x32xf32>
    %28 = arith.divf %26, %27 : vector<16x32xf32>
    %29 = vector.broadcast %17 : vector<1x32xf32> to vector<16x32xf32>
    %30 = arith.mulf %28, %29 : vector<16x32xf32>
    %cst_15 = arith.constant dense<0.000000e+00> : vector<16xf32>
    %31 = vector.multi_reduction <add>, %30, %cst_15 [1] : vector<16x32xf32> to vector<16xf32>
    %32 = vector.shape_cast %31 : vector<16xf32> to vector<16x1xf32>
    %33 = vector.broadcast %32 : vector<16x1xf32> to vector<16x2xf32>
    %34 = arith.mulf %33, %12 : vector<16x2xf32>
    %cst_16 = arith.constant 1.000000e+00 : f32
    %35 = vector.broadcast %cst_16 : f32 to vector<16x2xf32>
    %36 = arith.subf %12, %35 : vector<16x2xf32>
    %cst_17 = arith.constant 1.000000e+30 : f32
    %37 = vector.broadcast %cst_17 : f32 to vector<16x2xf32>
    %38 = arith.mulf %36, %37 : vector<16x2xf32>
    %39 = arith.addf %34, %38 : vector<16x2xf32>
    %cst_18 = arith.constant dense<0xFF800000> : vector<2xf32>
    %40 = vector.multi_reduction <maximumf>, %39, %cst_18 [0] : vector<16x2xf32> to vector<2xf32>
    %41 = vector.shape_cast %40 : vector<2xf32> to vector<1x2xf32>
    %42 = vector.broadcast %41 : vector<1x2xf32> to vector<16x2xf32>
    %43 = arith.subf %39, %42 : vector<16x2xf32>
    %44 = math.exp %43 : vector<16x2xf32>
    %45 = arith.mulf %44, %12 : vector<16x2xf32>
    %cst_19 = arith.constant dense<0.000000e+00> : vector<2xf32>
    %46 = vector.multi_reduction <add>, %45, %cst_19 [0] : vector<16x2xf32> to vector<2xf32>
    %47 = vector.shape_cast %46 : vector<2xf32> to vector<1x2xf32>
    %48 = tpu.reciprocal %47 : vector<1x2xf32> -> vector<1x2xf32>
    %49 = vector.broadcast %48 : vector<1x2xf32> to vector<16x2xf32>
    %50 = arith.mulf %45, %49 : vector<16x2xf32>
    %cst_20 = arith.constant 1.250000e-01 : f32
    %51 = vector.broadcast %cst_20 : f32 to vector<16x2xf32>
    %52 = arith.mulf %12, %51 : vector<16x2xf32>
    %c0_i32_21 = arith.constant 0 : i32
    %53 = arith.cmpi eq, %0, %c0_i32_21 : i32
    %54 = arith.extui %53 : i1 to i32
    %55 = arith.sitofp %54 : i32 to f32
    %56 = vector.broadcast %55 : f32 to vector<16x2xf32>
    %57 = arith.mulf %56, %52 : vector<16x2xf32>
    %cst_22 = arith.constant 1.000000e+00 : f32
    %58 = arith.subf %cst_22, %55 : f32
    %59 = vector.broadcast %58 : f32 to vector<16x2xf32>
    %60 = arith.mulf %59, %50 : vector<16x2xf32>
    %61 = arith.addf %57, %60 : vector<16x2xf32>
    %cst_23 = arith.constant dense<0.000000e+00> : vector<16xf32>
    %62 = vector.multi_reduction <add>, %61, %cst_23 [1] : vector<16x2xf32> to vector<16xf32>
    %63 = vector.shape_cast %62 : vector<16xf32> to vector<16x1xf32>
    %64 = vector.broadcast %63 : vector<16x1xf32> to vector<16x32xf32>
    %65 = arith.mulf %64, %6 : vector<16x32xf32>
    %cst_24 = arith.constant dense<0.000000e+00> : vector<2x32xf32>
    %66 = tpu.matmul %13, %65, %cst_24 {dimension_numbers = #tpu.dot_dimension_numbers<[1], [0], [0], [1], [0, 0, 1, 1], [], []>} : vector<2x16xf32>, vector<16x32xf32>, vector<2x32xf32> -> vector<2x32xf32>
    %c32_25 = arith.constant 32 : index
    %c0_26 = arith.constant 0 : index
    %67 = vector.load %arg4[%c32_25, %c0_26] : memref<112x128xf32, #tpu.memory_space<vmem>>, vector<67x128xf32>
    %c105 = arith.constant 105 : index
    %c0_27 = arith.constant 0 : index
    %68 = vector.load %arg4[%c105, %c0_27] : memref<112x128xf32, #tpu.memory_space<vmem>>, vector<1x128xf32>
    %69 = tpu.concatenate %4, %5, %66 in 1 : vector<2x32xf32>, vector<2x3xf32>, vector<2x32xf32> -> vector<2x67xf32>
    %cst_28 = arith.constant dense<0.000000e+00> : vector<2x128xf32>
    %70 = tpu.matmul %69, %67, %cst_28 {dimension_numbers = #tpu.dot_dimension_numbers<[1], [0], [0], [1], [0, 0, 1, 1], [], []>} : vector<2x67xf32>, vector<67x128xf32>, vector<2x128xf32> -> vector<2x128xf32>
    %71 = vector.broadcast %68 : vector<1x128xf32> to vector<2x128xf32>
    %72 = arith.addf %70, %71 : vector<2x128xf32>
    %73 = vector.extract_strided_slice %72 {offsets = [0, 0], sizes = [2, 32], strides = [1, 1]} : vector<2x128xf32> to vector<2x32xf32>
    %74 = arith.negf %73 : vector<2x32xf32>
    %75 = math.exp %74 : vector<2x32xf32>
    %cst_29 = arith.constant 1.000000e+00 : f32
    %76 = vector.broadcast %cst_29 : f32 to vector<2x32xf32>
    %77 = arith.addf %76, %75 : vector<2x32xf32>
    %78 = arith.divf %76, %77 : vector<2x32xf32>
    %79 = vector.extract_strided_slice %72 {offsets = [0, 32], sizes = [2, 32], strides = [1, 1]} : vector<2x128xf32> to vector<2x32xf32>
    %80 = arith.negf %79 : vector<2x32xf32>
    %81 = math.exp %80 : vector<2x32xf32>
    %cst_30 = arith.constant 1.000000e+00 : f32
    %82 = vector.broadcast %cst_30 : f32 to vector<2x32xf32>
    %83 = arith.addf %82, %81 : vector<2x32xf32>
    %84 = arith.divf %82, %83 : vector<2x32xf32>
    %85 = vector.extract_strided_slice %72 {offsets = [0, 64], sizes = [2, 32], strides = [1, 1]} : vector<2x128xf32> to vector<2x32xf32>
    %86 = vector.extract_strided_slice %72 {offsets = [0, 96], sizes = [2, 32], strides = [1, 1]} : vector<2x128xf32> to vector<2x32xf32>
    %87 = arith.mulf %78, %86 : vector<2x32xf32>
    %88 = arith.addf %85, %87 : vector<2x32xf32>
    %89 = math.tanh %88 : vector<2x32xf32>
    %cst_31 = arith.constant 1.000000e+00 : f32
    %90 = vector.broadcast %cst_31 : f32 to vector<2x32xf32>
    %91 = arith.subf %90, %84 : vector<2x32xf32>
    %92 = arith.mulf %91, %89 : vector<2x32xf32>
    %93 = arith.mulf %84, %4 : vector<2x32xf32>
    %94 = arith.addf %92, %93 : vector<2x32xf32>
    %c0_32 = arith.constant 0 : index
    %c64 = arith.constant 64 : index
    %95 = vector.load %arg4[%c0_32, %c64] : memref<112x128xf32, #tpu.memory_space<vmem>>, vector<32x32xf32>
    %c104_33 = arith.constant 104 : index
    %c64_34 = arith.constant 64 : index
    %96 = vector.load %arg4[%c104_33, %c64_34] : memref<112x128xf32, #tpu.memory_space<vmem>>, vector<1x32xf32>
    %c104_35 = arith.constant 104 : index
    %c96 = arith.constant 96 : index
    %97 = vector.load %arg4[%c104_35, %c96] : memref<112x128xf32, #tpu.memory_space<vmem>>, vector<1x32xf32>
    %c106 = arith.constant 106 : index
    %c0_36 = arith.constant 0 : index
    %98 = vector.load %arg4[%c106, %c0_36] : memref<112x128xf32, #tpu.memory_space<vmem>>, vector<1x32xf32>
    %c0_37 = arith.constant 0 : index
    %c96_38 = arith.constant 96 : index
    %99 = vector.load %arg4[%c0_37, %c96_38] : memref<112x128xf32, #tpu.memory_space<vmem>>, vector<32x3xf32>
    %c106_39 = arith.constant 106 : index
    %c32_40 = arith.constant 32 : index
    %100 = vector.load %arg4[%c106_39, %c32_40] : memref<112x128xf32, #tpu.memory_space<vmem>>, vector<1x3xf32>
    %cst_41 = arith.constant dense<0.000000e+00> : vector<2x32xf32>
    %101 = tpu.matmul %94, %95, %cst_41 {dimension_numbers = #tpu.dot_dimension_numbers<[1], [0], [0], [1], [0, 0, 1, 1], [], []>} : vector<2x32xf32>, vector<32x32xf32>, vector<2x32xf32> -> vector<2x32xf32>
    %102 = vector.broadcast %96 : vector<1x32xf32> to vector<2x32xf32>
    %103 = arith.addf %101, %102 : vector<2x32xf32>
    %cst_42 = arith.constant 0.000000e+00 : f32
    %104 = vector.broadcast %cst_42 : f32 to vector<2x32xf32>
    %105 = arith.maximumf %103, %104 : vector<2x32xf32>
    %cst_43 = arith.constant dense<0.000000e+00> : vector<32xf32>
    %106 = vector.multi_reduction <add>, %105, %cst_43 [0] : vector<2x32xf32> to vector<32xf32>
    %107 = vector.shape_cast %106 : vector<32xf32> to vector<1x32xf32>
    %cst_44 = arith.constant 2.000000e+00 : f32
    %108 = vector.broadcast %cst_44 : f32 to vector<1x32xf32>
    %109 = arith.divf %107, %108 : vector<1x32xf32>
    %110 = vector.broadcast %109 : vector<1x32xf32> to vector<2x32xf32>
    %111 = arith.subf %105, %110 : vector<2x32xf32>
    %112 = vector.broadcast %109 : vector<1x32xf32> to vector<2x32xf32>
    %113 = arith.subf %105, %112 : vector<2x32xf32>
    %114 = arith.mulf %111, %113 : vector<2x32xf32>
    %cst_45 = arith.constant dense<0.000000e+00> : vector<32xf32>
    %115 = vector.multi_reduction <add>, %114, %cst_45 [0] : vector<2x32xf32> to vector<32xf32>
    %116 = vector.shape_cast %115 : vector<32xf32> to vector<1x32xf32>
    %cst_46 = arith.constant 2.000000e+00 : f32
    %117 = vector.broadcast %cst_46 : f32 to vector<1x32xf32>
    %118 = arith.divf %116, %117 : vector<1x32xf32>
    %119 = vector.broadcast %109 : vector<1x32xf32> to vector<2x32xf32>
    %120 = arith.subf %105, %119 : vector<2x32xf32>
    %cst_47 = arith.constant 9.99999974E-6 : f32
    %121 = vector.broadcast %cst_47 : f32 to vector<1x32xf32>
    %122 = arith.addf %118, %121 : vector<1x32xf32>
    %123 = math.rsqrt %122 : vector<1x32xf32>
    %124 = vector.broadcast %123 : vector<1x32xf32> to vector<2x32xf32>
    %125 = arith.mulf %120, %124 : vector<2x32xf32>
    %126 = vector.broadcast %97 : vector<1x32xf32> to vector<2x32xf32>
    %127 = arith.mulf %125, %126 : vector<2x32xf32>
    %128 = vector.broadcast %98 : vector<1x32xf32> to vector<2x32xf32>
    %129 = arith.addf %127, %128 : vector<2x32xf32>
    %cst_48 = arith.constant dense<0.000000e+00> : vector<2x3xf32>
    %130 = tpu.matmul %129, %99, %cst_48 {dimension_numbers = #tpu.dot_dimension_numbers<[1], [0], [0], [1], [0, 0, 1, 1], [], []>} : vector<2x32xf32>, vector<32x3xf32>, vector<2x3xf32> -> vector<2x3xf32>
    %131 = vector.broadcast %100 : vector<1x3xf32> to vector<2x3xf32>
    %132 = arith.addf %130, %131 : vector<2x3xf32>
    %133 = tpu.concatenate %66, %94, %132 in 1 : vector<2x32xf32>, vector<2x32xf32>, vector<2x3xf32> -> vector<2x67xf32>
    %cst_49 = arith.constant 0.000000e+00 : f32
    %134 = vector.broadcast %cst_49 : f32 to vector<2x61xf32>
    %135 = tpu.concatenate %133, %134 in 1 : vector<2x67xf32>, vector<2x61xf32> -> vector<2x128xf32>
    %cst_50 = arith.constant 0.000000e+00 : f32
    %136 = vector.broadcast %cst_50 : f32 to vector<6x128xf32>
    %137 = tpu.concatenate %135, %136 in 0 : vector<2x128xf32>, vector<6x128xf32> -> vector<8x128xf32>
    %c0_51 = arith.constant 0 : index
    %c0_52 = arith.constant 0 : index
    %c0_53 = arith.constant 0 : index
    %138 = vector.load %arg5[%c0_51, %c0_52, %c0_53] : memref<1x8x128xf32, #tpu.memory_space<vmem>>, vector<1x8x128xf32>
    %139 = vector.shape_cast %138 : vector<1x8x128xf32> to vector<8x128xf32>
    %140 = vector.shape_cast %137 : vector<8x128xf32> to vector<1x8x128xf32>
    tpu.vector_store %arg5[%c0_51, %c0_52, %c0_53], %140 {strides = array<i32>} : memref<1x8x128xf32, #tpu.memory_space<vmem>>, vector<1x8x128xf32>,
    %141 = tpu.concatenate %94, %132 in 1 : vector<2x32xf32>, vector<2x3xf32> -> vector<2x35xf32>
    %cst_54 = arith.constant 0.000000e+00 : f32
    %142 = vector.broadcast %cst_54 : f32 to vector<2x93xf32>
    %143 = tpu.concatenate %141, %142 in 1 : vector<2x35xf32>, vector<2x93xf32> -> vector<2x128xf32>
    %cst_55 = arith.constant 0.000000e+00 : f32
    %144 = vector.broadcast %cst_55 : f32 to vector<6x128xf32>
    %145 = tpu.concatenate %143, %144 in 0 : vector<2x128xf32>, vector<6x128xf32> -> vector<8x128xf32>
    %c0_56 = arith.constant 0 : index
    %c0_57 = arith.constant 0 : index
    %146 = vector.load %arg6[%c0_56, %c0_57] : memref<8x128xf32, #tpu.memory_space<vmem>>, vector<8x128xf32>
    tpu.vector_store %arg6[%c0_56, %c0_57], %145 {strides = array<i32>} : memref<8x128xf32, #tpu.memory_space<vmem>>, vector<8x128xf32>,
    return
  }
  func.func @transform_0(%arg0: i32) -> (i32, i32) {
    %c0_i32 = arith.constant 0 : i32
    %c0_i32_0 = arith.constant 0 : i32
    %c0_i32_1 = arith.constant 0 : i32
    return %c0_i32, %c0_i32_0 : i32, i32
  }
  func.func @transform_1(%arg0: i32) -> (i32, i32) {
    %c0_i32 = arith.constant 0 : i32
    %c0_i32_0 = arith.constant 0 : i32
    %c0_i32_1 = arith.constant 0 : i32
    return %c0_i32, %c0_i32_0 : i32, i32
  }
  func.func @transform_2(%arg0: i32) -> (i32, i32) {
    %c0_i32 = arith.constant 0 : i32
    %c0_i32_0 = arith.constant 0 : i32
    %c0_i32_1 = arith.constant 0 : i32
    return %c0_i32, %c0_i32_0 : i32, i32
  }
  func.func @transform_3(%arg0: i32) -> (i32, i32) {
    %c0_i32 = arith.constant 0 : i32
    %c0_i32_0 = arith.constant 0 : i32
    %c0_i32_1 = arith.constant 0 : i32
    return %c0_i32, %c0_i32_0 : i32, i32
  }
  func.func @transform_4(%arg0: i32) -> (i32, i32, i32) {
    %c0_i32 = arith.constant 0 : i32
    %c0_i32_0 = arith.constant 0 : i32
    %c0_i32_1 = arith.constant 0 : i32
    return %arg0, %c0_i32, %c0_i32_0 : i32, i32, i32
  }
}

</mosaic_0001>

<llo_original>
// kernel: attn_decoder_forward.1
$region0: #{attn_decoder_forward.1}
  #allocation0 [shape = 'u32[]', space=smem, size = 0x4, offset = 0x4, fixed_abs, tag = 'smem constant byte address 0x4 - core index']
  #allocation1 [shape = 'u32[144,128]{1,0:T(1,128)}', space=vmem, size = 0x12000, scoped, tag = 'internal scratch']
  #allocation2 [shape = 'f32[8,128]{1,0:T(8,128)}', space=vmem, size = 0x1000, scoped, tag = 'scratch operand']
  %s0 = inlined_call_operand.hbm [shape: f32[16,32], index: 0, kind: input, shape index: {}]
  %s1 = inlined_call_operand.vmem [shape: f32[2,32], index: 1, kind: input, shape index: {}]
  %s2 = inlined_call_operand.vmem [shape: f32[2,3], index: 2, kind: input, shape index: {}]
  %s3 = inlined_call_operand.hbm [shape: f32[112,128], index: 3, kind: input, shape index: {}]
  %s4 = inlined_call_operand.vmem [shape: f32[1,8,128], index: 4, kind: output, shape index: {}]
  %s5 = sld [smem:[#allocation0]]
  $region38: #{attn_decoder_forward.1} parent=0
    _
  %s7 = ssub.s32 1, %s5
  %s8 = scalar_select 0, %s7, %s5
  $region1: #{attn_decoder_forward.1} parent=0
    #allocation3 [shape = 'u8[8192]{0}', space=vmem, size = 0x2000, scoped, tag = 'input window, operand 0, single buffered']
    #allocation4 [shape = 's32[1]{0}', space=sflag, size = 0x4, scoped, tag = 'scoped memory for attn_decoder_forward.1']
    #allocation5 [shape = 'u8[57344]{0}', space=vmem, size = 0xe000, scoped, tag = 'input window, operand 3, single buffered']
    #allocation6 [shape = 's32[1]{0}', space=sflag, size = 0x4, scoped, tag = 'scoped memory for attn_decoder_forward.1']
    %9 = vsyncpa [#allocation4], 0
    %10 = vsyncpa [#allocation6], 0
    // Predicated region
    $region2: #{attn_decoder_forward.1} parent=1 // pred_check
      _
    $region3: #{attn_decoder_forward.1} parent=1 // pred_check_branch
      %12 = sbr.rel (0) target = $region5
    $region4: #{attn_decoder_forward.1} parent=1 // pred_region
      %s14 = ssub.s32 256, 256
      %15 = vsyncadd [#allocation4], %s14
      %s16 = sshll.u32 [#allocation3], 4
      %s17 = int_to_ptr.vmem [resolvable:$true] %s16
      %22 = dma.hbm_to_vmem [thread:$0]  %s0, 256, %s17, [#allocation4], 128, 128, 8
    $region5: #{attn_decoder_forward.1} parent=1 // pred_fallthru
      _
    // Predicated region
    $region6: #{attn_decoder_forward.1} parent=1 // pred_check
      _
    $region7: #{attn_decoder_forward.1} parent=1 // pred_check_branch
      %24 = sbr.rel (0) target = $region9
    $region8: #{attn_decoder_forward.1} parent=1 // pred_region
      _
    $region9: #{attn_decoder_forward.1} parent=1 // pred_fallthru
      _
    // Predicated region
    $region10: #{attn_decoder_forward.1} parent=1 // pred_check
      _
    $region11: #{attn_decoder_forward.1} parent=1 // pred_check_branch
      %26 = sbr.rel (0) target = $region13
    $region12: #{attn_decoder_forward.1} parent=1 // pred_region
      _
    $region13: #{attn_decoder_forward.1} parent=1 // pred_fallthru
      _
    // Predicated region
    $region14: #{attn_decoder_forward.1} parent=1 // pred_check
      _
    $region15: #{attn_decoder_forward.1} parent=1 // pred_check_branch
      %28 = sbr.rel (0) target = $region17
    $region16: #{attn_decoder_forward.1} parent=1 // pred_region
      %s30 = ssub.s32 1792, 1792
      %31 = vsyncadd [#allocation6], %s30
      %s32 = sshll.u32 [#allocation5], 4
      %s33 = int_to_ptr.vmem [resolvable:$true] %s32
      %38 = dma.hbm_to_vmem [thread:$0]  %s3, 1792, %s33, [#allocation6], 128, 128, 8
    $region17: #{attn_decoder_forward.1} parent=1 // pred_fallthru
      _
    // Predicated region
    $region18: #{attn_decoder_forward.1} parent=1 // pred_check
      _
    $region19: #{attn_decoder_forward.1} parent=1 // pred_check_branch
      %40 = sbr.rel (0) target = $region21
    $region20: #{attn_decoder_forward.1} parent=1 // pred_region
      %41 = dma.done [#allocation4], 256
    $region21: #{attn_decoder_forward.1} parent=1 // pred_fallthru
      _
    // Predicated region
    $region22: #{attn_decoder_forward.1} parent=1 // pred_check
      _
    $region23: #{attn_decoder_forward.1} parent=1 // pred_check_branch
      %43 = sbr.rel (0) target = $region25
    $region24: #{attn_decoder_forward.1} parent=1 // pred_region
      %44 = dma.done [#allocation6], 1792
    $region25: #{attn_decoder_forward.1} parent=1 // pred_fallthru
      _
    %p45 = scmp.eq.s32.totalorder 0, 0
    // Predicated region
    $region26: #{attn_decoder_forward.1} parent=1 // pred_check
      %p46 = pneg %p45
    $region27: #{attn_decoder_forward.1} parent=1 // pred_check_branch
      %48 = sbr.rel (%p46) target = $region29
    $region28: #{attn_decoder_forward.1} parent=1 // pred_region
      %v49 = vld [vmem:[%s1] sm:$0x3]
      %v50 = vld [vmem:[%s2] sm:$0x3]
      %52 = vrot.lane.b32.xlu0 %v50, 32
      %v53 = vpop.permute.xlu0 %52
      %vm55 = vcmask 261120
      %v56 = vsel %vm55, %v49, %v53
      %vm57 = vcmask 285696
      %v58 = vsel %vm57, %v56, 0.0
      %vm59 = vcmask 1041408
      %v60 = vsel %vm59, %v58, 0.0
      %61 = vst [vmem:[#allocation2] sm:$0xff] %v60
    $region29: #{attn_decoder_forward.1} parent=1 // pred_fallthru
      _
    %v62 = vld [vmem:[#allocation2] sm:$0x3]
    %v63 = vld [vmem:[#allocation3] sm:$0xff]
    %v64 = vld [vmem:[#allocation3 + $0x8] sm:$0xff]
    %v65 = vlaneseq
    %v66 = vshrl.u32 %v65, 7
    %v67 = vlaneseq
    %v68 = vand.u32 %v67, 127
    %vm69 = vcmp.eq.s32.totalorder %v66, %v68
    %v70 = vsel %vm69, 1, 0
    %v71 = vcvt.s32.f32 %v70
    %v73 = vrot.slane %v71, 6
    %v75 = vrot.slane %v71, 4
    %v77 = vrot.slane %v71, 2
    %vm79 = vcmask 1041408
    %v80 = vsel %vm79, %v71, %v73
    %vm81 = vcmask 1043456
    %v82 = vsel %vm81, %v80, %v75
    %vm83 = vcmask 1045504
    %v84 = vsel %vm83, %v82, %v77
    %85 = vrot.lane.b32.xlu0 %v71, 2
    %v86 = vpop.permute.xlu0 %85
    %88 = vrot.lane.b32.xlu0 %v71, 4
    %v89 = vpop.permute.xlu0 %88
    %91 = vrot.lane.b32.xlu0 %v71, 6
    %v92 = vpop.permute.xlu0 %91
    %94 = vrot.lane.b32.xlu0 %v71, 8
    %v95 = vpop.permute.xlu0 %94
    %97 = vrot.lane.b32.xlu0 %v71, 10
    %v98 = vpop.permute.xlu0 %97
    %100 = vrot.lane.b32.xlu0 %v71, 12
    %v101 = vpop.permute.xlu0 %100
    %103 = vrot.lane.b32.xlu0 %v71, 14
    %v104 = vpop.permute.xlu0 %103
    %vm106 = vcmask 15360
    %v107 = vsel %vm106, %v71, %v86
    %vm108 = vcmask 31744
    %v109 = vsel %vm108, %v107, %v89
    %vm110 = vcmask 48128
    %v111 = vsel %vm110, %v109, %v92
    %vm112 = vcmask 64512
    %v113 = vsel %vm112, %v111, %v95
    %vm114 = vcmask 80896
    %v115 = vsel %vm114, %v113, %v98
    %vm116 = vcmask 97280
    %v117 = vsel %vm116, %v115, %v101
    %vm118 = vcmask 113664
    %v119 = vsel %vm118, %v117, %v104
    %v120 = vld [vmem:[#allocation5] sm:$0xff]
    %v121 = vld [vmem:[#allocation5 + $0x8] sm:$0xff]
    %v122 = vld [vmem:[#allocation5 + $0x10] sm:$0xff]
    %v123 = vld [vmem:[#allocation5 + $0x18] sm:$0xff]
    %v124 = vld [vmem:[#allocation5 + $0x68] sm:$0x1]
    %v125 = vlaneseq
    %v126 = vshrl.u32 %v125, 7
    %v127 = vsub.s32 0, %v126
    %v128 = vrot.slane %v124, %v127
    %133 = vrot.lane.b32.xlu0 %v120, 96
    %v134 = vpop.permute.xlu0 %133
    %135 = vrot.lane.b32.xlu0 %v121, 96
    %v136 = vpop.permute.xlu0 %135
    %137 = vrot.lane.b32.xlu0 %v122, 96
    %v138 = vpop.permute.xlu0 %137
    %139 = vrot.lane.b32.xlu0 %v123, 96
    %v140 = vpop.permute.xlu0 %139
    %vm145 = vcmask 261120
    %v147 = vsel %vm145, %v62, 0
    %149 = vmatprep.subr.mxu0 0.0
    %150 = vmatpush1.msra.mxu0 %v134
    %151 = vmatprep.subr.mxu0 0.0
    %152 = vmatpush1.msra.mxu0 %v136
    %153 = vmatprep.subr.mxu0 0.0
    %154 = vmatpush1.msra.mxu0 %v138
    %155 = vmatprep.subr.mxu0 0.0
    %156 = vmatpush1.msra.mxu0 %v140
    %157 = vmatprep.subr.mxu0 0.0
    %158 = vmatpush1.msra.mxu0 0.0
    %159 = vmatprep.subr.mxu0 0.0
    %160 = vmatpush1.msra.mxu0 0.0
    %161 = vmatprep.subr.mxu0 0.0
    %162 = vmatpush1.msra.mxu0 0.0
    %163 = vmatprep.subr.mxu0 0.0
    %164 = vmatpush1.msra.mxu0 0.0
    %165 = vmatprep.subr.mxu0 0.0
    %166 = vmatpush1.msra.mxu0 0.0
    %167 = vmatprep.subr.mxu0 0.0
    %168 = vmatpush1.msra.mxu0 0.0
    %169 = vmatprep.subr.mxu0 0.0
    %170 = vmatpush1.msra.mxu0 0.0
    %171 = vmatprep.subr.mxu0 0.0
    %172 = vmatpush1.msra.mxu0 0.0
    %173 = vmatprep.subr.mxu0 0.0
    %174 = vmatpush1.msra.mxu0 0.0
    %175 = vmatprep.subr.mxu0 0.0
    %176 = vmatpush1.msra.mxu0 0.0
    %177 = vmatprep.subr.mxu0 0.0
    %178 = vmatpush1.msra.mxu0 0.0
    %179 = vmatprep.subr.mxu0 0.0
    %180 = vmatpush1.msra.mxu0 0.0
    %181 = vmatprep.subr.mxu0 0.0
    %182 = vmatpush1.msra.mxu0 0.0
    %183 = vmatprep.subr.mxu0 0.0
    %184 = vmatpush1.msra.mxu0 0.0
    %185 = vmatprep.subr.mxu0 0.0
    %186 = vmatpush1.msra.mxu0 0.0
    %187 = vmatprep.subr.mxu0 0.0
    %188 = vmatpush1.msra.mxu0 0.0
    %189 = vmatprep.subr.mxu0 0.0
    %190 = vmatpush1.msra.mxu0 0.0
    %191 = vmatprep.subr.mxu0 0.0
    %192 = vmatpush1.msra.mxu0 0.0
    %193 = vmatprep.subr.mxu0 0.0
    %194 = vmatpush1.msra.mxu0 0.0
    %195 = vmatprep.subr.mxu0 0.0
    %196 = vmatpush1.msra.mxu0 0.0
    %197 = vmatprep.subr.mxu0 0.0
    %198 = vmatpush1.msra.mxu0 0.0
    %199 = vmatprep.subr.mxu0 0.0
    %200 = vmatpush1.msra.mxu0 0.0
    %201 = vmatprep.subr.mxu0 0.0
    %202 = vmatpush1.msra.mxu0 0.0
    %203 = vmatprep.subr.mxu0 0.0
    %204 = vmatpush1.msra.mxu0 0.0
    %205 = vmatprep.subr.mxu0 0.0
    %206 = vmatpush1.msra.mxu0 0.0
    %207 = vmatprep.subr.mxu0 0.0
    %208 = vmatpush1.msra.mxu0 0.0
    %209 = vmatprep.subr.mxu0 0.0
    %210 = vmatpush1.msra.mxu0 0.0
    %211 = vmatprep.subr.mxu0 0.0
    %212 = vmatpush1.msra.mxu0 0.0
    %213 = vmatprep.mubr.f32.mxu0 0.0
    %214 = vmatmul.mubr.f32.gmra.mrb[0].mxu0 %v147
    %v215 = vpop.f32.mrb[0].mxu0
    %v216 = vadd.f32 %v128, %v215
    %v217 = vpop.f32.mrb[0].mxu0
    %218 = vdwg.mxu0
    %v220 = vrot.slane %v216, 6
    %v222 = vrot.slane %v216, 4
    %v224 = vrot.slane %v216, 2
    %v226 = vsel %vm79, %v216, %v220
    %v227 = vsel %vm81, %v226, %v222
    %v228 = vsel %vm83, %v227, %v224
    %v230 = vsel %vm145, %v63, 0
    %v233 = vsel %vm145, %v64, 0
    %235 = vmatprep.subr.mxu0 0.0
    %236 = vmatpush1.msra.mxu0 %v120
    %237 = vmatprep.subr.mxu0 0.0
    %238 = vmatpush1.msra.mxu0 %v121
    %239 = vmatprep.subr.mxu0 0.0
    %240 = vmatpush1.msra.mxu0 %v122
    %241 = vmatprep.subr.mxu0 0.0
    %242 = vmatpush1.msra.mxu0 %v123
    %243 = vmatprep.subr.mxu0 0.0
    %244 = vmatpush1.msra.mxu0 0.0
    %245 = vmatprep.subr.mxu0 0.0
    %246 = vmatpush1.msra.mxu0 0.0
    %247 = vmatprep.subr.mxu0 0.0
    %248 = vmatpush1.msra.mxu0 0.0
    %249 = vmatprep.subr.mxu0 0.0
    %250 = vmatpush1.msra.mxu0 0.0
    %251 = vmatprep.subr.mxu0 0.0
    %252 = vmatpush1.msra.mxu0 0.0
    %253 = vmatprep.subr.mxu0 0.0
    %254 = vmatpush1.msra.mxu0 0.0
    %255 = vmatprep.subr.mxu0 0.0
    %256 = vmatpush1.msra.mxu0 0.0
    %257 = vmatprep.subr.mxu0 0.0
    %258 = vmatpush1.msra.mxu0 0.0
    %259 = vmatprep.subr.mxu0 0.0
    %260 = vmatpush1.msra.mxu0 0.0
    %261 = vmatprep.subr.mxu0 0.0
    %262 = vmatpush1.msra.mxu0 0.0
    %263 = vmatprep.subr.mxu0 0.0
    %264 = vmatpush1.msra.mxu0 0.0
    %265 = vmatprep.subr.mxu0 0.0
    %266 = vmatpush1.msra.mxu0 0.0
    %267 = vmatprep.subr.mxu0 0.0
    %268 = vmatpush1.msra.mxu0 0.0
    %269 = vmatprep.subr.mxu0 0.0
    %270 = vmatpush1.msra.mxu0 0.0
    %271 = vmatprep.subr.mxu0 0.0
    %272 = vmatpush1.msra.mxu0 0.0
    %273 = vmatprep.subr.mxu0 0.0
    %274 = vmatpush1.msra.mxu0 0.0
    %275 = vmatprep.subr.mxu0 0.0
    %276 = vmatpush1.msra.mxu0 0.0
    %277 = vmatprep.subr.mxu0 0.0
    %278 = vmatpush1.msra.mxu0 0.0
    %279 = vmatprep.subr.mxu0 0.0
    %280 = vmatpush1.msra.mxu0 0.0
    %281 = vmatprep.subr.mxu0 0.0
    %282 = vmatpush1.msra.mxu0 0.0
    %283 = vmatprep.subr.mxu0 0.0
    %284 = vmatpush1.msra.mxu0 0.0
    %285 = vmatprep.subr.mxu0 0.0
    %286 = vmatpush1.msra.mxu0 0.0
    %287 = vmatprep.subr.mxu0 0.0
    %288 = vmatpush1.msra.mxu0 0.0
    %289 = vmatprep.subr.mxu0 0.0
    %290 = vmatpush1.msra.mxu0 0.0
    %291 = vmatprep.subr.mxu0 0.0
    %292 = vmatpush1.msra.mxu0 0.0
    %293 = vmatprep.subr.mxu0 0.0
    %294 = vmatpush1.msra.mxu0 0.0
    %295 = vmatprep.subr.mxu0 0.0
    %296 = vmatpush1.msra.mxu0 0.0
    %297 = vmatprep.subr.mxu0 0.0
    %298 = vmatpush1.msra.mxu0 0.0
    %299 = vmatprep.mubr.f32.mxu0 0.0
    %300 = vmatmul.mubr.f32.gmra.mrb[0].mxu0 %v230
    %v301 = vpop.f32.mrb[0].mxu0
    %v302 = vadd.f32 %v228, %v301
    %v303 = vpop.f32.mrb[0].mxu0
    %304 = vmatprep.mubr.f32.mxu0 0.0
    %305 = vmatmul.mubr.f32.gmra.mrb[0].mxu0 %v233
    %v306 = vpop.f32.mrb[0].mxu0
    %v307 = vadd.f32 %v228, %v306
    %v308 = vpop.f32.mrb[0].mxu0
    %309 = vdwg.mxu0
    %v310 = vxor.u32 %v302, 2147483648
    %v311 = vxor.u32 %v307, 2147483648
    %v312 = vmul.f32 %v310, 1.442695
    %v313 = vpow.pop %v312
    %v314 = vmul.f32 %v311, 1.442695
    %v315 = vpow.pop %v314
    %v316 = vadd.f32 %v313, 1.0
    %v317 = vadd.f32 %v315, 1.0
    %v318 = vrcp.pop %v316
    %v319 = vmul.f32 1.0, %v318
    %v320 = vrcp.pop %v317
    %v321 = vmul.f32 1.0, %v320
    %323 = vrot.lane.b32.xlu0 %v128, 96
    %v324 = vpop.permute.xlu0 %323
    %v326 = vmul.f32 %v319, %v324
    %v327 = vmul.f32 %v321, %v324
    %v328 = vsel %vm145, %v326, 0.0
    %329 = vadd.xlane.f32.xlu0 %v328
    %v330 = vpop.xlane.xlu0 %329
    %v331 = vsel %vm145, %v327, 0.0
    %332 = vadd.xlane.f32.xlu0 %v331
    %v333 = vpop.xlane.xlu0 %332
    %v334 = vmul.f32 %v330, %v84
    %v335 = vmul.f32 %v333, %v84
    %v336 = vsub.f32 %v84, 1.0
    %v337 = vmul.f32 %v336, 1e+30
    %v338 = vadd.f32 %v334, %v337
    %v339 = vadd.f32 %v335, %v337
    %v340 = vsel %vm106, %v338, -inf
    %v341 = vsel %vm106, %v339, -inf
    %v342 = vmax.f32 %v340, %v341
    %v343 = vrot.slane %v342, 4
    %v344 = vmax.f32 %v342, %v343
    %v345 = vrot.slane %v344, 2
    %v346 = vmax.f32 %v344, %v345
    %v347 = vrot.slane %v346, 1
    %v348 = vmax.f32 %v346, %v347
    %v349 = vsub.f32 %v338, %v348
    %v350 = vsub.f32 %v339, %v348
    %v351 = vmul.f32 %v349, 1.442695
    %v352 = vpow.pop %v351
    %v353 = vmul.f32 %v350, 1.442695
    %v354 = vpow.pop %v353
    %v355 = vmul.f32 %v352, %v84
    %v356 = vmul.f32 %v354, %v84
    %v357 = vsel %vm106, %v355, 0.0
    %v358 = vsel %vm106, %v356, 0.0
    %v359 = vadd.f32 %v357, %v358
    %v360 = vrot.slane %v359, 4
    %v361 = vadd.f32 %v359, %v360
    %v362 = vrot.slane %v361, 2
    %v363 = vadd.f32 %v361, %v362
    %v364 = vrot.slane %v363, 1
    %v365 = vadd.f32 %v363, %v364
    %v366 = vrcp.pop %v365
    %v367 = vmul.f32 %v355, %v366
    %v368 = vmul.f32 %v356, %v366
    %v369 = vmul.f32 %v84, 0.125
    %s370 = scalar_select %p45, 1, 0
    %s371 = scvt.s32.f32 %s370
    %v372 = vstv %s371
    %v373 = vmul.f32 %v372, %v369
    %s374 = ssub.f32 1.0, %s371
    %v375 = vstv %s374
    %v376 = vmul.f32 %v375, %v367
    %v377 = vmul.f32 %v375, %v368
    %v378 = vadd.f32 %v373, %v376
    %v379 = vadd.f32 %v373, %v377
    %v380 = vsel %vm106, %v378, 0.0
    %381 = vadd.xlane.f32.xlu0 %v380
    %v382 = vpop.xlane.xlu0 %381
    %v383 = vsel %vm106, %v379, 0.0
    %384 = vadd.xlane.f32.xlu0 %v383
    %v385 = vpop.xlane.xlu0 %384
    %v386 = vmul.f32 %v382, %v63
    %v387 = vmul.f32 %v385, %v64
    %vm388 = vcmask 130048
    %v390 = vsel %vm388, %v119, 0
    %392 = vmatprep.subr.mxu0 0.0
    %393 = vmatpush1.msra.mxu0 %v386
    %394 = vmatprep.subr.mxu0 0.0
    %395 = vmatpush1.msra.mxu0 %v387
    %396 = vmatprep.subr.mxu0 0.0
    %397 = vmatpush1.msra.mxu0 0.0
    %398 = vmatprep.subr.mxu0 0.0
    %399 = vmatpush1.msra.mxu0 0.0
    %400 = vmatprep.subr.mxu0 0.0
    %401 = vmatpush1.msra.mxu0 0.0
    %402 = vmatprep.subr.mxu0 0.0
    %403 = vmatpush1.msra.mxu0 0.0
    %404 = vmatprep.subr.mxu0 0.0
    %405 = vmatpush1.msra.mxu0 0.0
    %406 = vmatprep.subr.mxu0 0.0
    %407 = vmatpush1.msra.mxu0 0.0
    %408 = vmatprep.subr.mxu0 0.0
    %409 = vmatpush1.msra.mxu0 0.0
    %410 = vmatprep.subr.mxu0 0.0
    %411 = vmatpush1.msra.mxu0 0.0
    %412 = vmatprep.subr.mxu0 0.0
    %413 = vmatpush1.msra.mxu0 0.0
    %414 = vmatprep.subr.mxu0 0.0
    %415 = vmatpush1.msra.mxu0 0.0
    %416 = vmatprep.subr.mxu0 0.0
    %417 = vmatpush1.msra.mxu0 0.0
    %418 = vmatprep.subr.mxu0 0.0
    %419 = vmatpush1.msra.mxu0 0.0
    %420 = vmatprep.subr.mxu0 0.0
    %421 = vmatpush1.msra.mxu0 0.0
    %422 = vmatprep.subr.mxu0 0.0
    %423 = vmatpush1.msra.mxu0 0.0
    %424 = vmatprep.subr.mxu0 0.0
    %425 = vmatpush1.msra.mxu0 0.0
    %426 = vmatprep.subr.mxu0 0.0
    %427 = vmatpush1.msra.mxu0 0.0
    %428 = vmatprep.subr.mxu0 0.0
    %429 = vmatpush1.msra.mxu0 0.0
    %430 = vmatprep.subr.mxu0 0.0
    %431 = vmatpush1.msra.mxu0 0.0
    %432 = vmatprep.subr.mxu0 0.0
    %433 = vmatpush1.msra.mxu0 0.0
    %434 = vmatprep.subr.mxu0 0.0
    %435 = vmatpush1.msra.mxu0 0.0
    %436 = vmatprep.subr.mxu0 0.0
    %437 = vmatpush1.msra.mxu0 0.0
    %438 = vmatprep.subr.mxu0 0.0
    %439 = vmatpush1.msra.mxu0 0.0
    %440 = vmatprep.subr.mxu0 0.0
    %441 = vmatpush1.msra.mxu0 0.0
    %442 = vmatprep.subr.mxu0 0.0
    %443 = vmatpush1.msra.mxu0 0.0
    %444 = vmatprep.subr.mxu0 0.0
    %445 = vmatpush1.msra.mxu0 0.0
    %446 = vmatprep.subr.mxu0 0.0
    %447 = vmatpush1.msra.mxu0 0.0
    %448 = vmatprep.subr.mxu0 0.0
    %449 = vmatpush1.msra.mxu0 0.0
    %450 = vmatprep.subr.mxu0 0.0
    %451 = vmatpush1.msra.mxu0 0.0
    %452 = vmatprep.subr.mxu0 0.0
    %453 = vmatpush1.msra.mxu0 0.0
    %454 = vmatprep.subr.mxu0 0.0
    %455 = vmatpush1.msra.mxu0 0.0
    %456 = vmatprep.mubr.f32.mxu0 0.0
    %457 = vmatmul.mubr.f32.gmra.mrb[0].mxu0 %v390
    %v458 = vpop.f32.mrb[0].mxu0
    %v459 = vadd.f32 0.0, %v458
    %v460 = vpop.f32.mrb[0].mxu0
    %461 = vdwg.mxu0
    %v462 = vld [vmem:[#allocation5 + $0x20] sm:$0xff]
    %v463 = vld [vmem:[#allocation5 + $0x28] sm:$0xff]
    %v464 = vld [vmem:[#allocation5 + $0x30] sm:$0xff]
    %v465 = vld [vmem:[#allocation5 + $0x38] sm:$0xff]
    %v466 = vld [vmem:[#allocation5 + $0x40] sm:$0xff]
    %v467 = vld [vmem:[#allocation5 + $0x48] sm:$0xff]
    %v468 = vld [vmem:[#allocation5 + $0x50] sm:$0xff]
    %v469 = vld [vmem:[#allocation5 + $0x58] sm:$0xff]
    %v470 = vld [vmem:[#allocation5 + $0x60] sm:$0x7]
    %v471 = vld [vmem:[#allocation5 + $0x69] sm:$0x1]
    %473 = vrot.lane.b32.xlu0 %v459, 35
    %v474 = vpop.permute.xlu0 %473
    %vm476 = vcmask 285696
    %v477 = vsel %vm476, %v62, %v474
    %v478 = vlaneseq
    %v479 = vshrl.u32 %v478, 7
    %v480 = vsub.s32 0, %v479
    %v481 = vrot.slane %v471, %v480
    %vm482 = vcmask 547840
    %v484 = vsel %vm482, %v477, 0
    %vm486 = vcmask 1042432
    %v488 = vsel %vm486, %v470, 0
    %490 = vmatprep.subr.mxu0 0.0
    %491 = vmatpush1.msra.mxu0 %v462
    %492 = vmatprep.subr.mxu0 0.0
    %493 = vmatpush1.msra.mxu0 %v463
    %494 = vmatprep.subr.mxu0 0.0
    %495 = vmatpush1.msra.mxu0 %v464
    %496 = vmatprep.subr.mxu0 0.0
    %497 = vmatpush1.msra.mxu0 %v465
    %498 = vmatprep.subr.mxu0 0.0
    %499 = vmatpush1.msra.mxu0 %v466
    %500 = vmatprep.subr.mxu0 0.0
    %501 = vmatpush1.msra.mxu0 %v467
    %502 = vmatprep.subr.mxu0 0.0
    %503 = vmatpush1.msra.mxu0 %v468
    %504 = vmatprep.subr.mxu0 0.0
    %505 = vmatpush1.msra.mxu0 %v469
    %506 = vmatprep.subr.mxu0 0.0
    %507 = vmatpush1.msra.mxu0 %v488
    %508 = vmatprep.subr.mxu0 0.0
    %509 = vmatpush1.msra.mxu0 0.0
    %510 = vmatprep.subr.mxu0 0.0
    %511 = vmatpush1.msra.mxu0 0.0
    %512 = vmatprep.subr.mxu0 0.0
    %513 = vmatpush1.msra.mxu0 0.0
    %514 = vmatprep.subr.mxu0 0.0
    %515 = vmatpush1.msra.mxu0 0.0
    %516 = vmatprep.subr.mxu0 0.0
    %517 = vmatpush1.msra.mxu0 0.0
    %518 = vmatprep.subr.mxu0 0.0
    %519 = vmatpush1.msra.mxu0 0.0
    %520 = vmatprep.subr.mxu0 0.0
    %521 = vmatpush1.msra.mxu0 0.0
    %522 = vmatprep.subr.mxu0 0.0
    %523 = vmatpush1.msra.mxu0 0.0
    %524 = vmatprep.subr.mxu0 0.0
    %525 = vmatpush1.msra.mxu0 0.0
    %526 = vmatprep.subr.mxu0 0.0
    %527 = vmatpush1.msra.mxu0 0.0
    %528 = vmatprep.subr.mxu0 0.0
    %529 = vmatpush1.msra.mxu0 0.0
    %530 = vmatprep.subr.mxu0 0.0
    %531 = vmatpush1.msra.mxu0 0.0
    %532 = vmatprep.subr.mxu0 0.0
    %533 = vmatpush1.msra.mxu0 0.0
    %534 = vmatprep.subr.mxu0 0.0
    %535 = vmatpush1.msra.mxu0 0.0
    %536 = vmatprep.subr.mxu0 0.0
    %537 = vmatpush1.msra.mxu0 0.0
    %538 = vmatprep.subr.mxu0 0.0
    %539 = vmatpush1.msra.mxu0 0.0
    %540 = vmatprep.subr.mxu0 0.0
    %541 = vmatpush1.msra.mxu0 0.0
    %542 = vmatprep.subr.mxu0 0.0
    %543 = vmatpush1.msra.mxu0 0.0
    %544 = vmatprep.subr.mxu0 0.0
    %545 = vmatpush1.msra.mxu0 0.0
    %546 = vmatprep.subr.mxu0 0.0
    %547 = vmatpush1.msra.mxu0 0.0
    %548 = vmatprep.subr.mxu0 0.0
    %549 = vmatpush1.msra.mxu0 0.0
    %550 = vmatprep.subr.mxu0 0.0
    %551 = vmatpush1.msra.mxu0 0.0
    %552 = vmatprep.subr.mxu0 0.0
    %553 = vmatpush1.msra.mxu0 0.0
    %554 = vmatprep.mubr.f32.mxu0 0.0
    %555 = vmatmul.mubr.f32.gmra.mrb[0].mxu0 %v484
    %v556 = vpop.f32.mrb[0].mxu0
    %v557 = vadd.f32 %v481, %v556
    %v558 = vpop.f32.mrb[0].mxu0
    %559 = vdwg.mxu0
    %v560 = vxor.u32 %v557, 2147483648
    %v561 = vmul.f32 %v560, 1.442695
    %v562 = vpow.pop %v561
    %v563 = vadd.f32 %v562, 1.0
    %v564 = vrcp.pop %v563
    %v565 = vmul.f32 1.0, %v564
    %567 = vrot.lane.b32.xlu0 %v557, 32
    %v568 = vpop.permute.xlu0 %567
    %v570 = vmul.f32 %v565, %v568
    %572 = vrot.lane.b32.xlu0 %v570, 64
    %v573 = vpop.permute.xlu0 %572
    %v575 = vadd.f32 %v557, %v573
    %v576 = vtanh.pop %v575
    %v577 = vsub.f32 1.0, %v565
    %579 = vrot.lane.b32.xlu0 %v576, 96
    %v580 = vpop.permute.xlu0 %579
    %v582 = vmul.f32 %v577, %v580
    %583 = vrot.lane.b32.xlu0 %v62, 32
    %v584 = vpop.permute.xlu0 %583
    %v586 = vmul.f32 %v565, %v584
    %v587 = vadd.f32 %v582, %v586
    %v588 = vld [vmem:[#allocation5 + $0x6a] sm:$0x1]
    %590 = vrot.lane.b32.xlu0 %v587, 96
    %v591 = vpop.permute.xlu0 %590
    %592 = vrot.lane.b32.xlu0 %v120, 64
    %v593 = vpop.permute.xlu0 %592
    %594 = vrot.lane.b32.xlu0 %v121, 64
    %v595 = vpop.permute.xlu0 %594
    %596 = vrot.lane.b32.xlu0 %v122, 64
    %v597 = vpop.permute.xlu0 %596
    %598 = vrot.lane.b32.xlu0 %v123, 64
    %v599 = vpop.permute.xlu0 %598
    %604 = vrot.lane.b32.xlu0 %v128, 64
    %v605 = vpop.permute.xlu0 %604
    %v607 = vsel %vm145, %v591, 0
    %609 = vmatprep.subr.mxu0 0.0
    %610 = vmatpush1.msra.mxu0 %v593
    %611 = vmatprep.subr.mxu0 0.0
    %612 = vmatpush1.msra.mxu0 %v595
    %613 = vmatprep.subr.mxu0 0.0
    %614 = vmatpush1.msra.mxu0 %v597
    %615 = vmatprep.subr.mxu0 0.0
    %616 = vmatpush1.msra.mxu0 %v599
    %617 = vmatprep.subr.mxu0 0.0
    %618 = vmatpush1.msra.mxu0 0.0
    %619 = vmatprep.subr.mxu0 0.0
    %620 = vmatpush1.msra.mxu0 0.0
    %621 = vmatprep.subr.mxu0 0.0
    %622 = vmatpush1.msra.mxu0 0.0
    %623 = vmatprep.subr.mxu0 0.0
    %624 = vmatpush1.msra.mxu0 0.0
    %625 = vmatprep.subr.mxu0 0.0
    %626 = vmatpush1.msra.mxu0 0.0
    %627 = vmatprep.subr.mxu0 0.0
    %628 = vmatpush1.msra.mxu0 0.0
    %629 = vmatprep.subr.mxu0 0.0
    %630 = vmatpush1.msra.mxu0 0.0
    %631 = vmatprep.subr.mxu0 0.0
    %632 = vmatpush1.msra.mxu0 0.0
    %633 = vmatprep.subr.mxu0 0.0
    %634 = vmatpush1.msra.mxu0 0.0
    %635 = vmatprep.subr.mxu0 0.0
    %636 = vmatpush1.msra.mxu0 0.0
    %637 = vmatprep.subr.mxu0 0.0
    %638 = vmatpush1.msra.mxu0 0.0
    %639 = vmatprep.subr.mxu0 0.0
    %640 = vmatpush1.msra.mxu0 0.0
    %641 = vmatprep.subr.mxu0 0.0
    %642 = vmatpush1.msra.mxu0 0.0
    %643 = vmatprep.subr.mxu0 0.0
    %644 = vmatpush1.msra.mxu0 0.0
    %645 = vmatprep.subr.mxu0 0.0
    %646 = vmatpush1.msra.mxu0 0.0
    %647 = vmatprep.subr.mxu0 0.0
    %648 = vmatpush1.msra.mxu0 0.0
    %649 = vmatprep.subr.mxu0 0.0
    %650 = vmatpush1.msra.mxu0 0.0
    %651 = vmatprep.subr.mxu0 0.0
    %652 = vmatpush1.msra.mxu0 0.0
    %653 = vmatprep.subr.mxu0 0.0
    %654 = vmatpush1.msra.mxu0 0.0
    %655 = vmatprep.subr.mxu0 0.0
    %656 = vmatpush1.msra.mxu0 0.0
    %657 = vmatprep.subr.mxu0 0.0
    %658 = vmatpush1.msra.mxu0 0.0
    %659 = vmatprep.subr.mxu0 0.0
    %660 = vmatpush1.msra.mxu0 0.0
    %661 = vmatprep.subr.mxu0 0.0
    %662 = vmatpush1.msra.mxu0 0.0
    %663 = vmatprep.subr.mxu0 0.0
    %664 = vmatpush1.msra.mxu0 0.0
    %665 = vmatprep.subr.mxu0 0.0
    %666 = vmatpush1.msra.mxu0 0.0
    %667 = vmatprep.subr.mxu0 0.0
    %668 = vmatpush1.msra.mxu0 0.0
    %669 = vmatprep.subr.mxu0 0.0
    %670 = vmatpush1.msra.mxu0 0.0
    %671 = vmatprep.subr.mxu0 0.0
    %672 = vmatpush1.msra.mxu0 0.0
    %673 = vmatprep.mubr.f32.mxu0 0.0
    %674 = vmatmul.mubr.f32.gmra.mrb[0].mxu0 %v607
    %v675 = vpop.f32.mrb[0].mxu0
    %v676 = vadd.f32 %v605, %v675
    %v677 = vpop.f32.mrb[0].mxu0
    %678 = vdwg.mxu0
    %v679 = vmax.f32 %v676, 0.0
    %vm680 = vcmask 254976
    %v681 = vsel %vm680, %v679, 0.0
    %v682 = vrot.slane %v681, 4
    %v683 = vadd.f32 %v681, %v682
    %v684 = vrot.slane %v683, 2
    %v685 = vadd.f32 %v683, %v684
    %v686 = vrot.slane %v685, 1
    %v687 = vadd.f32 %v685, %v686
    %v688 = vrcp.pop 2.0
    %v689 = vmul.f32 %v687, %v688
    %v690 = vsub.f32 %v679, %v689
    %v691 = vmul.f32 %v690, %v690
    %v692 = vsel %vm680, %v691, 0.0
    %v693 = vrot.slane %v692, 4
    %v694 = vadd.f32 %v692, %v693
    %v695 = vrot.slane %v694, 2
    %v696 = vadd.f32 %v694, %v695
    %v697 = vrot.slane %v696, 1
    %v698 = vadd.f32 %v696, %v697
    %v699 = vmul.f32 %v698, %v688
    %v700 = vadd.f32 %v699, 1e-05
    %v701 = vrsqrt.pop %v700
    %v702 = vmul.f32 %v690, %v701
    %703 = vrot.lane.b32.xlu0 %v128, 32
    %v704 = vpop.permute.xlu0 %703
    %v706 = vmul.f32 %v702, %v704
    %v707 = vlaneseq
    %v708 = vshrl.u32 %v707, 7
    %v709 = vsub.s32 0, %v708
    %v710 = vrot.slane %v588, %v709
    %v711 = vadd.f32 %v706, %v710
    %712 = vrot.lane.b32.xlu0 %v120, 32
    %v713 = vpop.permute.xlu0 %712
    %714 = vrot.lane.b32.xlu0 %v121, 32
    %v715 = vpop.permute.xlu0 %714
    %716 = vrot.lane.b32.xlu0 %v122, 32
    %v717 = vpop.permute.xlu0 %716
    %718 = vrot.lane.b32.xlu0 %v123, 32
    %v719 = vpop.permute.xlu0 %718
    %725 = vrot.lane.b32.xlu0 %v710, 96
    %v726 = vpop.permute.xlu0 %725
    %v729 = vsel %vm145, %v711, 0
    %731 = vmatprep.subr.mxu0 0.0
    %732 = vmatpush1.msra.mxu0 %v713
    %733 = vmatprep.subr.mxu0 0.0
    %734 = vmatpush1.msra.mxu0 %v715
    %735 = vmatprep.subr.mxu0 0.0
    %736 = vmatpush1.msra.mxu0 %v717
    %737 = vmatprep.subr.mxu0 0.0
    %738 = vmatpush1.msra.mxu0 %v719
    %739 = vmatprep.subr.mxu0 0.0
    %740 = vmatpush1.msra.mxu0 0.0
    %741 = vmatprep.subr.mxu0 0.0
    %742 = vmatpush1.msra.mxu0 0.0
    %743 = vmatprep.subr.mxu0 0.0
    %744 = vmatpush1.msra.mxu0 0.0
    %745 = vmatprep.subr.mxu0 0.0
    %746 = vmatpush1.msra.mxu0 0.0
    %747 = vmatprep.subr.mxu0 0.0
    %748 = vmatpush1.msra.mxu0 0.0
    %749 = vmatprep.subr.mxu0 0.0
    %750 = vmatpush1.msra.mxu0 0.0
    %751 = vmatprep.subr.mxu0 0.0
    %752 = vmatpush1.msra.mxu0 0.0
    %753 = vmatprep.subr.mxu0 0.0
    %754 = vmatpush1.msra.mxu0 0.0
    %755 = vmatprep.subr.mxu0 0.0
    %756 = vmatpush1.msra.mxu0 0.0
    %757 = vmatprep.subr.mxu0 0.0
    %758 = vmatpush1.msra.mxu0 0.0
    %759 = vmatprep.subr.mxu0 0.0
    %760 = vmatpush1.msra.mxu0 0.0
    %761 = vmatprep.subr.mxu0 0.0
    %762 = vmatpush1.msra.mxu0 0.0
    %763 = vmatprep.subr.mxu0 0.0
    %764 = vmatpush1.msra.mxu0 0.0
    %765 = vmatprep.subr.mxu0 0.0
    %766 = vmatpush1.msra.mxu0 0.0
    %767 = vmatprep.subr.mxu0 0.0
    %768 = vmatpush1.msra.mxu0 0.0
    %769 = vmatprep.subr.mxu0 0.0
    %770 = vmatpush1.msra.mxu0 0.0
    %771 = vmatprep.subr.mxu0 0.0
    %772 = vmatpush1.msra.mxu0 0.0
    %773 = vmatprep.subr.mxu0 0.0
    %774 = vmatpush1.msra.mxu0 0.0
    %775 = vmatprep.subr.mxu0 0.0
    %776 = vmatpush1.msra.mxu0 0.0
    %777 = vmatprep.subr.mxu0 0.0
    %778 = vmatpush1.msra.mxu0 0.0
    %779 = vmatprep.subr.mxu0 0.0
    %780 = vmatpush1.msra.mxu0 0.0
    %781 = vmatprep.subr.mxu0 0.0
    %782 = vmatpush1.msra.mxu0 0.0
    %783 = vmatprep.subr.mxu0 0.0
    %784 = vmatpush1.msra.mxu0 0.0
    %785 = vmatprep.subr.mxu0 0.0
    %786 = vmatpush1.msra.mxu0 0.0
    %787 = vmatprep.subr.mxu0 0.0
    %788 = vmatpush1.msra.mxu0 0.0
    %789 = vmatprep.subr.mxu0 0.0
    %790 = vmatpush1.msra.mxu0 0.0
    %791 = vmatprep.subr.mxu0 0.0
    %792 = vmatpush1.msra.mxu0 0.0
    %793 = vmatprep.subr.mxu0 0.0
    %794 = vmatpush1.msra.mxu0 0.0
    %795 = vmatprep.mubr.f32.mxu0 0.0
    %796 = vmatmul.mubr.f32.gmra.mrb[0].mxu0 %v729
    %v797 = vpop.f32.mrb[0].mxu0
    %v798 = vadd.f32 %v726, %v797
    %v799 = vpop.f32.mrb[0].mxu0
    %800 = vdwg.mxu0
    %802 = vrot.lane.b32.xlu0 %v798, 64
    %v803 = vpop.permute.xlu0 %802
    %v805 = vsel %vm145, %v459, %v587
    %vm806 = vcmask 523264
    %v807 = vsel %vm806, %v805, %v803
    %v808 = vsel %vm482, %v807, 0.0
    %v809 = vsel %vm79, %v808, 0.0
    %810 = vst [vmem:[%s4] sm:$0xff] %v809
    %812 = vrot.lane.b32.xlu0 %v798, 32
    %v813 = vpop.permute.xlu0 %812
    %v815 = vsel %vm145, %v591, %v813
    %v816 = vsel %vm476, %v815, 0.0
    %v817 = vsel %vm79, %v816, 0.0
    %818 = vst [vmem:[#allocation2] sm:$0xff] %v817
    // Predicated region
    $region30: #{attn_decoder_forward.1} parent=1 // pred_check
      _
    $region31: #{attn_decoder_forward.1} parent=1 // pred_check_branch
      %820 = sbr.rel (0) target = $region33
    $region32: #{attn_decoder_forward.1} parent=1 // pred_region
      _
    $region33: #{attn_decoder_forward.1} parent=1 // pred_fallthru
      _
    // Predicated region
    $region34: #{attn_decoder_forward.1} parent=1 // pred_check
      _
    $region35: #{attn_decoder_forward.1} parent=1 // pred_check_branch
      %822 = sbr.rel (0) target = $region37
    $region36: #{attn_decoder_forward.1} parent=1 // pred_region
      _
    $region37: #{attn_decoder_forward.1} parent=1 // pred_fallthru
      _
    %823 = vsyncpa [#allocation4], 1
    %824 = vsyncpa [#allocation6], 1

</llo_original>
